<compile_context>
chip_gen: v7x
topology: tpu7x:2x2x1
jax: 0.10.0
libtpu: 0.0.40
codegen_flags: <defaults>
</compile_context>

<pallas_src>
import jax
import jax.numpy as jnp
from jax import lax
from jax.experimental import pallas as pl
from jax.experimental.pallas import tpu as pltpu

K = 3            # kernel_size
PAD = 1          # padding
EPS = 1e-5       # nn.BatchNorm2d default eps
LANE = 128       # TPU lane width
CONV_DTYPE = jnp.float32   # bf16 halves intermediate HBM traffic; kept f32 for 1e-4 check


def _round_up(x, m):
    return (x + m - 1) // m * m


# ----------------------------------------------------------------------------
# Pass 1: fused ConvTranspose(k3,s1,p1) as one deep MXU matmul + BN partial stats
# ----------------------------------------------------------------------------
def _conv_stats_kernel(x_ref, w_ref, conv_ref, sum_ref, sq_ref, lhs_ref):
    """B padded images -> lane-dense conv rows + per-block BN partial stats.

    x_ref   : (B, H+2, CPAD)      padded rows, lanes = w*Cin + cin (zero-padded)
    w_ref   : (K*CPAD, Cout*W)    fused block-banded weight (all K taps stacked)
    conv_ref: (B, H, Cout*W)      conv output, lanes = c*W + w (channel-major)
    sum_ref : (1, 1, Cout*W)      per-lane sum            (partial BN stats)
    sq_ref  : (1, 1, Cout*W)      per-lane sum of squares (partial BN stats)
    lhs_ref : (B*H, K*CPAD)       VMEM scratch: fused matmul LHS
    """
    B, Hp, CP = x_ref.shape
    H = Hp - 2 * PAD

    # Stack the K shifted row-windows of every image along the contraction
    # axis so the whole conv is a single (B*H, K*CPAD) x (K*CPAD, Cout*W) dot.
    for b in range(B):
        xb = x_ref[b]                                        # (Hp, CPAD)
        for kh in range(K):
            lhs_ref[b * H:(b + 1) * H, kh * CP:(kh + 1) * CP] = xb[kh:kh + H, :]

    acc = jnp.dot(lhs_ref[...], w_ref[...],
                  preferred_element_type=jnp.float32)        # (B*H, Cout*W)

    for b in range(B):
        conv_ref[b] = acc[b * H:(b + 1) * H, :].astype(conv_ref.dtype)

    # Bias omitted on purpose: cancelled exactly by training-mode BN mean sub.
    sum_ref[0] = jnp.sum(acc, axis=0, keepdims=True)
    sq_ref[0] = jnp.sum(acc * acc, axis=0, keepdims=True)


# ----------------------------------------------------------------------------
# Pass 2: normalize + ReLU, stored directly in NCHW layout (no extra HBM pass)
# ----------------------------------------------------------------------------
def _bn_relu_nchw_kernel(y_ref, scale_ref, shift_ref, o_ref):
    """Row band: y*scale + shift (== BN affine), ReLU, written as an NCHW block.

    y_ref    : (1, th, Cout*W)   conv rows, lanes = c*W + w
    scale_ref: (1, Cout*W)       gamma * rsqrt(var + eps), repeated per w
    shift_ref: (1, Cout*W)       beta  - mean * scale,     repeated per w
    o_ref    : (1, Cout, th, W)  final activations (block of the NCHW output)
    """
    cout = o_ref.shape[1]
    w = o_ref.shape[3]
    y = jnp.maximum(y_ref[0] * scale_ref[...] + shift_ref[...], 0.0)  # (th, Cout*W)
    # Fold the (h, c*W+w) -> (c, h, w) relayout into the stores: one contiguous
    # lane slice per channel.  This replaces the full-tensor XLA transpose pass.
    for c in range(cout):
        o_ref[0, c, :, :] = y[:, c * w:(c + 1) * w]


# ----------------------------------------------------------------------------
# Host-side helpers (run at trace time; shapes are static)
# ----------------------------------------------------------------------------
def _fused_banded_weights(w_t, W, cpad):
    """ConvTranspose2d weight (Cin, Cout, K, K) -> fused banded (K*cpad, Cout*W).

    band[kh*cpad + (w+kw)*Cin + cin, c*W + w] = w_t[cin, c, K-1-kh, K-1-kw]
    (spatially flipped taps: "SAME" conv == ConvTranspose(k3, s1, p1)).
    Channel-major output columns (c*W + w) let pass 2 write NCHW directly.
    Runs once, outside the hot path in a real model.
    """
    Cin, Cout = w_t.shape[0], w_t.shape[1]
    Wp = W + 2 * PAD
    w_flip = jnp.transpose(w_t[:, :, ::-1, ::-1], (2, 3, 0, 1)).astype(jnp.float32)
    band = jnp.zeros((K, Wp, Cin, Cout, W), jnp.float32)
    for kw in range(K):
        band = band + jnp.einsum(
            "uw,kic->kuicw",
            jnp.eye(Wp, W, k=-kw, dtype=jnp.float32),
            w_flip[:, kw],
        )
    band = band.reshape(K, Wp * Cin, Cout * W)
    band = jnp.pad(band, ((0, 0), (0, cpad - Wp * Cin), (0, 0)))  # lane-pad rows
    return band.reshape(K * cpad, Cout * W)


def _pick_image_block(N, H, target_rows=256):
    """Divisor B of N: batch images per pass-1 step so the matmul M dim is
    reasonably tall, but keep >= 2 grid steps when N >= 2 (v7x megacore)."""
    divisors = [d for d in range(1, N + 1) if N % d == 0]
    fits = [d for d in divisors if d * H <= target_rows] or [1]
    B = max(fits)
    while N >= 2 and N // B < 2 and B > 1:
        B = max(d for d in divisors if d < B)
    return B


def _pick_row_band(H, lane_width, budget_bytes=2 << 20):
    """Largest row band th (divisor of H, multiple of 8 unless th == H) whose
    f32 tile stays under the per-buffer byte budget."""
    cap = max(1, budget_bytes // (lane_width * 4))
    if H <= cap:
        return H
    best = None
    for t in range(8, min(H, cap) + 1, 8):
        if H % t == 0:
            best = t
    return best if best is not None else H


def _vmem_limit_bytes():
    """Generation-aware scoped-VMEM request (v7x has 64 MiB, v5e/v6e 128 MiB)."""
    try:
        cap = pltpu.get_tpu_info().vmem_capacity_bytes
    except Exception:
        cap = 64 * 1024 * 1024
    return min(cap // 2, 32 * 1024 * 1024)


# ----------------------------------------------------------------------------
# Public entry point
# ----------------------------------------------------------------------------
@jax.jit
def deconv_bnorm_relu_2d(x_nchw, w_t, bias, gamma, beta):
    """Forward of DEConvBNormRelu2d: ConvTranspose2d(k3,s1,p1,bias) +
    BatchNorm2d (training-mode batch stats) + ReLU.

    x_nchw: (N, Cin, H, W); w_t: ConvTranspose2d weight (Cin, Cout, K, K).
    Returns (N, Cout, H, W).
    """
    del bias  # per-channel constant before training-mode BN is exactly
              # cancelled by the mean subtraction -> dead compute, removed.
    N, Cin, H, W = x_nchw.shape
    Cout = w_t.shape[1]
    Hp, Wp = H + 2 * PAD, W + 2 * PAD
    CW = Cout * W                                  # output lane index: c*W + w
    CPAD = _round_up(Wp * Cin, LANE)               # lane-dense contraction pad
    vmem_limit = _vmem_limit_bytes()

    # --- wrapper glue (layout only; XLA fuses transpose + pad + lane-pad) ---
    x_nhwc = jnp.transpose(x_nchw, (0, 2, 3, 1)).astype(jnp.float32)
    x_pad = jnp.pad(x_nhwc, ((0, 0), (PAD, PAD), (PAD, PAD), (0, 0)))
    x_rows = x_pad.reshape(N, Hp, Wp * Cin)        # contiguous -> free reshape
    x_rows = jnp.pad(x_rows, ((0, 0), (0, 0), (0, CPAD - Wp * Cin)))
    w_band = _fused_banded_weights(w_t, W, CPAD)   # (K*CPAD, Cout*W)

    B = _pick_image_block(N, H)
    G = N // B

    # --- pass 1: conv (one deep matmul per B-image block) + BN partial stats ---
    conv_out, lane_sum, lane_sq = pl.pallas_call(
        _conv_stats_kernel,
        out_shape=(
            jax.ShapeDtypeStruct((N, H, CW), CONV_DTYPE),
            jax.ShapeDtypeStruct((G, 1, CW), jnp.float32),
            jax.ShapeDtypeStruct((G, 1, CW), jnp.float32),
        ),
        grid=(G,),
        in_specs=[
            pl.BlockSpec((B, Hp, CPAD), lambda g: (g, 0, 0)),
            # NOTE: grid-invariant weight; single-buffering it (pl.Buffered(1))
            # would halve its VMEM footprint on v7x, left double-buffered here
            # for broad compatibility (it is only ~K*CPAD*CW*4 bytes).
            pl.BlockSpec((K * CPAD, CW), lambda g: (0, 0)),
        ],
        out_specs=(
            pl.BlockSpec((B, H, CW), lambda g: (g, 0, 0)),
            pl.BlockSpec((1, 1, CW), lambda g: (g, 0, 0)),
            pl.BlockSpec((1, 1, CW), lambda g: (g, 0, 0)),
        ),
        scratch_shapes=[pltpu.VMEM((B * H, K * CPAD), jnp.float32)],
        compiler_params=pltpu.CompilerParams(
            dimension_semantics=("parallel",),     # image blocks independent
            vmem_limit_bytes=vmem_limit,
        ),
    )(x_rows, w_band)

    # --- tiny O(Cout*W) epilogue: fold partial sums into BN scale/shift ---
    count = N * H * W
    ch_sum = jnp.sum(lane_sum, axis=(0, 1)).reshape(Cout, W).sum(axis=1)
    ch_sq = jnp.sum(lane_sq, axis=(0, 1)).reshape(Cout, W).sum(axis=1)
    mean = ch_sum / count
    var = ch_sq / count - mean * mean              # biased var (BN training mode)
    scale = gamma.astype(jnp.float32) * lax.rsqrt(var + EPS)
    shift = beta.astype(jnp.float32) - mean * scale
    scale_vec = jnp.repeat(scale, W).reshape(1, CW)   # lane layout: c*W + w
    shift_vec = jnp.repeat(shift, W).reshape(1, CW)

    # --- pass 2: normalize + ReLU, written straight into NCHW (no XLA transpose) ---
    th = _pick_row_band(H, CW)
    out = pl.pallas_call(
        _bn_relu_nchw_kernel,
        out_shape=jax.ShapeDtypeStruct((N, Cout, H, W), jnp.float32),
        grid=(N, H // th),
        in_specs=[
            pl.BlockSpec((1, th, CW), lambda n, i: (n, i, 0)),
            pl.BlockSpec((1, CW), lambda n, i: (0, 0)),
            pl.BlockSpec((1, CW), lambda n, i: (0, 0)),
        ],
        out_specs=pl.BlockSpec((1, Cout, th, W), lambda n, i: (n, 0, i, 0)),
        compiler_params=pltpu.CompilerParams(
            dimension_semantics=("parallel", "parallel"),
            vmem_limit_bytes=vmem_limit,
        ),
    )(conv_out, scale_vec, shift_vec)

    return out


# ----------------------------------------------------------------------------
# Pure-JAX reference + self-check
# ----------------------------------------------------------------------------
def _reference(x_nchw, w_t, bias, gamma, beta):
    """ConvTranspose2d(k3,s1,p1,bias) + BatchNorm2d(train) + ReLU, NCHW."""
    x_nhwc = jnp.transpose(x_nchw, (0, 2, 3, 1))
    w_hwio = jnp.transpose(w_t[:, :, ::-1, ::-1], (2, 3, 0, 1))   # (kh,kw,Cin,Cout)
    y = lax.conv_general_dilated(
        x_nhwc, w_hwio, window_strides=(1, 1), padding="SAME",
        dimension_numbers=("NHWC", "HWIO", "NHWC"),
    ) + bias.reshape(1, 1, 1, -1)
    mean = jnp.mean(y, axis=(0, 1, 2), keepdims=True)
    var = jnp.mean((y - mean) ** 2, axis=(0, 1, 2), keepdims=True)
    y = (y - mean) * lax.rsqrt(var + EPS) * gamma.reshape(1, 1, 1, -1) \
        + beta.reshape(1, 1, 1, -1)
    return jnp.transpose(jnp.maximum(y, 0.0), (0, 3, 1, 2))


if __name__ == "__main__":
    key = jax.random.PRNGKey(0)
    kx, kw, kb = jax.random.split(key, 3)

    N, Cin, H, W = 2, 4, 16, 16
    Cout = 8

    x = jax.random.normal(kx, (N, Cin, H, W), dtype=jnp.float32)
    # ConvTranspose2d weight layout: (in_channels, out_channels, kH, kW)
    w_t = 0.1 * jax.random.normal(kw, (Cin, Cout, K, K), dtype=jnp.float32)
    bias = 0.1 * jax.random.normal(kb, (Cout,), dtype=jnp.float32)
    # BatchNorm2d default init: weight (gamma) = 1, bias (beta) = 0
    gamma = jnp.ones((Cout,), jnp.float32)
    beta = jnp.zeros((Cout,), jnp.float32)

    out = deconv_bnorm_relu_2d(x, w_t, bias, gamma, beta)
    jax.block_until_ready(out)

    ref = _reference(x, w_t, bias, gamma, beta)
    assert out.shape == (N, Cout, H, W)
    assert jnp.allclose(out, ref, atol=1e-4, rtol=1e-4), \
        float(jnp.max(jnp.abs(out - ref)))

    print("KERNEL_OK")
</pallas_src>

<mosaic_0001>
module attributes {stable_mosaic.version = 11 : i64} {
  func.func @_conv_stats_kernel(%arg0: i32, %arg1: memref<1x18x128xf32, #tpu.memory_space<vmem>>, %arg2: memref<384x128xf32, #tpu.memory_space<vmem>>, %arg3: memref<1x16x128xf32, #tpu.memory_space<vmem>>, %arg4: memref<1x1x128xf32, #tpu.memory_space<vmem>>, %arg5: memref<1x1x128xf32, #tpu.memory_space<vmem>>, %arg6: memref<16x384xf32, #tpu.memory_space<vmem>>) attributes {dimension_semantics = [#tpu.dimension_semantics<parallel>], iteration_bounds = array<i64: 2>, scalar_prefetch = 0 : i64, scratch_operands = 1 : i64, tpu.core_type = #tpu.core_type<tc>, window_params = [{transform_indices = @transform_0, window_bounds = array<i64: 1, 18, 128>}, {pipeline_mode = #tpu.pipeline_mode<synchronous>, transform_indices = @transform_1, window_bounds = array<i64: 384, 128>}, {transform_indices = @transform_2, window_bounds = array<i64: 1, 16, 128>}, {transform_indices = @transform_3, window_bounds = array<i64: 1, 1, 128>}, {transform_indices = @transform_4, window_bounds = array<i64: 1, 1, 128>}]} {
    %c0 = arith.constant 0 : index
    %c0_0 = arith.constant 0 : index
    %c0_1 = arith.constant 0 : index
    %0 = vector.load %arg1[%c0, %c0_0, %c0_1] : memref<1x18x128xf32, #tpu.memory_space<vmem>>, vector<1x18x128xf32>
    %1 = vector.shape_cast %0 : vector<1x18x128xf32> to vector<18x128xf32>
    %2 = vector.extract_strided_slice %1 {offsets = [0, 0], sizes = [16, 128], strides = [1, 1]} : vector<18x128xf32> to vector<16x128xf32>
    %c0_2 = arith.constant 0 : index
    %c0_3 = arith.constant 0 : index
    %3 = vector.load %arg6[%c0_2, %c0_3] : memref<16x384xf32, #tpu.memory_space<vmem>>, vector<16x128xf32>
    tpu.vector_store %arg6[%c0_2, %c0_3], %2 {strides = array<i32>} : memref<16x384xf32, #tpu.memory_space<vmem>>, vector<16x128xf32>,
    %4 = vector.extract_strided_slice %1 {offsets = [1, 0], sizes = [16, 128], strides = [1, 1]} : vector<18x128xf32> to vector<16x128xf32>
    %c0_4 = arith.constant 0 : index
    %c128 = arith.constant 128 : index
    %5 = vector.load %arg6[%c0_4, %c128] : memref<16x384xf32, #tpu.memory_space<vmem>>, vector<16x128xf32>
    tpu.vector_store %arg6[%c0_4, %c128], %4 {strides = array<i32>} : memref<16x384xf32, #tpu.memory_space<vmem>>, vector<16x128xf32>,
    %6 = vector.extract_strided_slice %1 {offsets = [2, 0], sizes = [16, 128], strides = [1, 1]} : vector<18x128xf32> to vector<16x128xf32>
    %c0_5 = arith.constant 0 : index
    %c256 = arith.constant 256 : index
    %7 = vector.load %arg6[%c0_5, %c256] : memref<16x384xf32, #tpu.memory_space<vmem>>, vector<16x128xf32>
    tpu.vector_store %arg6[%c0_5, %c256], %6 {strides = array<i32>} : memref<16x384xf32, #tpu.memory_space<vmem>>, vector<16x128xf32>,
    %c0_6 = arith.constant 0 : index
    %c0_7 = arith.constant 0 : index
    %8 = vector.load %arg6[%c0_6, %c0_7] : memref<16x384xf32, #tpu.memory_space<vmem>>, vector<16x384xf32>
    %c0_8 = arith.constant 0 : index
    %c0_9 = arith.constant 0 : index
    %9 = vector.load %arg2[%c0_8, %c0_9] : memref<384x128xf32, #tpu.memory_space<vmem>>, vector<384x128xf32>
    %cst = arith.constant dense<0.000000e+00> : vector<16x128xf32>
    %10 = tpu.matmul %8, %9, %cst {dimension_numbers = #tpu.dot_dimension_numbers<[1], [0], [0], [1], [0, 0, 1, 1], [], []>} : vector<16x384xf32>, vector<384x128xf32>, vector<16x128xf32> -> vector<16x128xf32>
    %c0_10 = arith.constant 0 : index
    %c0_11 = arith.constant 0 : index
    %c0_12 = arith.constant 0 : index
    %11 = vector.load %arg3[%c0_10, %c0_11, %c0_12] : memref<1x16x128xf32, #tpu.memory_space<vmem>>, vector<1x16x128xf32>
    %12 = vector.shape_cast %11 : vector<1x16x128xf32> to vector<16x128xf32>
    %13 = vector.shape_cast %10 : vector<16x128xf32> to vector<1x16x128xf32>
    tpu.vector_store %arg3[%c0_10, %c0_11, %c0_12], %13 {strides = array<i32>} : memref<1x16x128xf32, #tpu.memory_space<vmem>>, vector<1x16x128xf32>,
    %cst_13 = arith.constant dense<0.000000e+00> : vector<128xf32>
    %14 = vector.multi_reduction <add>, %10, %cst_13 [0] : vector<16x128xf32> to vector<128xf32>
    %15 = vector.shape_cast %14 : vector<128xf32> to vector<1x128xf32>
    %c0_14 = arith.constant 0 : index
    %c0_15 = arith.constant 0 : index
    %c0_16 = arith.constant 0 : index
    %16 = vector.load %arg4[%c0_14, %c0_15, %c0_16] : memref<1x1x128xf32, #tpu.memory_space<vmem>>, vector<1x1x128xf32>
    %17 = vector.shape_cast %16 : vector<1x1x128xf32> to vector<1x128xf32>
    %18 = vector.shape_cast %15 : vector<1x128xf32> to vector<1x1x128xf32>
    tpu.vector_store %arg4[%c0_14, %c0_15, %c0_16], %18 {strides = array<i32>} : memref<1x1x128xf32, #tpu.memory_space<vmem>>, vector<1x1x128xf32>,
    %19 = arith.mulf %10, %10 : vector<16x128xf32>
    %cst_17 = arith.constant dense<0.000000e+00> : vector<128xf32>
    %20 = vector.multi_reduction <add>, %19, %cst_17 [0] : vector<16x128xf32> to vector<128xf32>
    %21 = vector.shape_cast %20 : vector<128xf32> to vector<1x128xf32>
    %c0_18 = arith.constant 0 : index
    %c0_19 = arith.constant 0 : index
    %c0_20 = arith.constant 0 : index
    %22 = vector.load %arg5[%c0_18, %c0_19, %c0_20] : memref<1x1x128xf32, #tpu.memory_space<vmem>>, vector<1x1x128xf32>
    %23 = vector.shape_cast %22 : vector<1x1x128xf32> to vector<1x128xf32>
    %24 = vector.shape_cast %21 : vector<1x128xf32> to vector<1x1x128xf32>
    tpu.vector_store %arg5[%c0_18, %c0_19, %c0_20], %24 {strides = array<i32>} : memref<1x1x128xf32, #tpu.memory_space<vmem>>, vector<1x1x128xf32>,
    return
  }
  func.func @transform_0(%arg0: i32) -> (i32, i32, i32) {
    %c0_i32 = arith.constant 0 : i32
    %c0_i32_0 = arith.constant 0 : i32
    %c0_i32_1 = arith.constant 0 : i32
    return %arg0, %c0_i32, %c0_i32_0 : i32, i32, i32
  }
  func.func @transform_1(%arg0: i32) -> (i32, i32) {
    %c0_i32 = arith.constant 0 : i32
    %c0_i32_0 = arith.constant 0 : i32
    %c0_i32_1 = arith.constant 0 : i32
    return %c0_i32, %c0_i32_0 : i32, i32
  }
  func.func @transform_2(%arg0: i32) -> (i32, i32, i32) {
    %c0_i32 = arith.constant 0 : i32
    %c0_i32_0 = arith.constant 0 : i32
    %c0_i32_1 = arith.constant 0 : i32
    return %arg0, %c0_i32, %c0_i32_0 : i32, i32, i32
  }
  func.func @transform_3(%arg0: i32) -> (i32, i32, i32) {
    %c0_i32 = arith.constant 0 : i32
    %c0_i32_0 = arith.constant 0 : i32
    %c0_i32_1 = arith.constant 0 : i32
    return %arg0, %c0_i32, %c0_i32_0 : i32, i32, i32
  }
  func.func @transform_4(%arg0: i32) -> (i32, i32, i32) {
    %c0_i32 = arith.constant 0 : i32
    %c0_i32_0 = arith.constant 0 : i32
    %c0_i32_1 = arith.constant 0 : i32
    return %arg0, %c0_i32, %c0_i32_0 : i32, i32, i32
  }
}

module attributes {stable_mosaic.version = 11 : i64} {
  func.func @_bn_relu_nchw_kernel(%arg0: i32, %arg1: i32, %arg2: memref<1x16x128xf32, #tpu.memory_space<vmem>>, %arg3: memref<1x128xf32, #tpu.memory_space<vmem>>, %arg4: memref<1x128xf32, #tpu.memory_space<vmem>>, %arg5: memref<1x8x16x16xf32, #tpu.memory_space<vmem>>) attributes {dimension_semantics = [#tpu.dimension_semantics<parallel>, #tpu.dimension_semantics<parallel>], iteration_bounds = array<i64: 2, 1>, scalar_prefetch = 0 : i64, scratch_operands = 0 : i64, tpu.core_type = #tpu.core_type<tc>, window_params = [{transform_indices = @transform_0, window_bounds = array<i64: 1, 16, 128>}, {pipeline_mode = #tpu.pipeline_mode<synchronous>, transform_indices = @transform_1, window_bounds = array<i64: 1, 128>}, {pipeline_mode = #tpu.pipeline_mode<synchronous>, transform_indices = @transform_2, window_bounds = array<i64: 1, 128>}, {transform_indices = @transform_3, window_bounds = array<i64: 1, 8, 16, 16>}]} {
    %c0 = arith.constant 0 : index
    %c0_0 = arith.constant 0 : index
    %c0_1 = arith.constant 0 : index
    %0 = vector.load %arg2[%c0, %c0_0, %c0_1] : memref<1x16x128xf32, #tpu.memory_space<vmem>>, vector<1x16x128xf32>
    %1 = vector.shape_cast %0 : vector<1x16x128xf32> to vector<16x128xf32>
    %c0_2 = arith.constant 0 : index
    %c0_3 = arith.constant 0 : index
    %2 = vector.load %arg3[%c0_2, %c0_3] : memref<1x128xf32, #tpu.memory_space<vmem>>, vector<1x128xf32>
    %3 = vector.broadcast %2 : vector<1x128xf32> to vector<16x128xf32>
    %4 = arith.mulf %1, %3 : vector<16x128xf32>
    %c0_4 = arith.constant 0 : index
    %c0_5 = arith.constant 0 : index
    %5 = vector.load %arg4[%c0_4, %c0_5] : memref<1x128xf32, #tpu.memory_space<vmem>>, vector<1x128xf32>
    %6 = vector.broadcast %5 : vector<1x128xf32> to vector<16x128xf32>
    %7 = arith.addf %4, %6 : vector<16x128xf32>
    %cst = arith.constant 0.000000e+00 : f32
    %8 = vector.broadcast %cst : f32 to vector<16x128xf32>
    %9 = arith.maximumf %7, %8 : vector<16x128xf32>
    %10 = vector.extract_strided_slice %9 {offsets = [0, 0], sizes = [16, 16], strides = [1, 1]} : vector<16x128xf32> to vector<16x16xf32>
    %c0_6 = arith.constant 0 : index
    %c0_7 = arith.constant 0 : index
    %c0_8 = arith.constant 0 : index
    %c0_9 = arith.constant 0 : index
    %11 = vector.load %arg5[%c0_6, %c0_7, %c0_8, %c0_9] : memref<1x8x16x16xf32, #tpu.memory_space<vmem>>, vector<1x1x16x16xf32>
    %12 = vector.shape_cast %11 : vector<1x1x16x16xf32> to vector<16x16xf32>
    %13 = vector.shape_cast %10 : vector<16x16xf32> to vector<1x1x16x16xf32>
    tpu.vector_store %arg5[%c0_6, %c0_7, %c0_8, %c0_9], %13 {strides = array<i32>} : memref<1x8x16x16xf32, #tpu.memory_space<vmem>>, vector<1x1x16x16xf32>,
    %14 = vector.extract_strided_slice %9 {offsets = [0, 16], sizes = [16, 16], strides = [1, 1]} : vector<16x128xf32> to vector<16x16xf32>
    %c0_10 = arith.constant 0 : index
    %c1 = arith.constant 1 : index
    %c0_11 = arith.constant 0 : index
    %c0_12 = arith.constant 0 : index
    %15 = vector.load %arg5[%c0_10, %c1, %c0_11, %c0_12] : memref<1x8x16x16xf32, #tpu.memory_space<vmem>>, vector<1x1x16x16xf32>
    %16 = vector.shape_cast %15 : vector<1x1x16x16xf32> to vector<16x16xf32>
    %17 = vector.shape_cast %14 : vector<16x16xf32> to vector<1x1x16x16xf32>
    tpu.vector_store %arg5[%c0_10, %c1, %c0_11, %c0_12], %17 {strides = array<i32>} : memref<1x8x16x16xf32, #tpu.memory_space<vmem>>, vector<1x1x16x16xf32>,
    %18 = vector.extract_strided_slice %9 {offsets = [0, 32], sizes = [16, 16], strides = [1, 1]} : vector<16x128xf32> to vector<16x16xf32>
    %c0_13 = arith.constant 0 : index
    %c2 = arith.constant 2 : index
    %c0_14 = arith.constant 0 : index
    %c0_15 = arith.constant 0 : index
    %19 = vector.load %arg5[%c0_13, %c2, %c0_14, %c0_15] : memref<1x8x16x16xf32, #tpu.memory_space<vmem>>, vector<1x1x16x16xf32>
    %20 = vector.shape_cast %19 : vector<1x1x16x16xf32> to vector<16x16xf32>
    %21 = vector.shape_cast %18 : vector<16x16xf32> to vector<1x1x16x16xf32>
    tpu.vector_store %arg5[%c0_13, %c2, %c0_14, %c0_15], %21 {strides = array<i32>} : memref<1x8x16x16xf32, #tpu.memory_space<vmem>>, vector<1x1x16x16xf32>,
    %22 = vector.extract_strided_slice %9 {offsets = [0, 48], sizes = [16, 16], strides = [1, 1]} : vector<16x128xf32> to vector<16x16xf32>
    %c0_16 = arith.constant 0 : index
    %c3 = arith.constant 3 : index
    %c0_17 = arith.constant 0 : index
    %c0_18 = arith.constant 0 : index
    %23 = vector.load %arg5[%c0_16, %c3, %c0_17, %c0_18] : memref<1x8x16x16xf32, #tpu.memory_space<vmem>>, vector<1x1x16x16xf32>
    %24 = vector.shape_cast %23 : vector<1x1x16x16xf32> to vector<16x16xf32>
    %25 = vector.shape_cast %22 : vector<16x16xf32> to vector<1x1x16x16xf32>
    tpu.vector_store %arg5[%c0_16, %c3, %c0_17, %c0_18], %25 {strides = array<i32>} : memref<1x8x16x16xf32, #tpu.memory_space<vmem>>, vector<1x1x16x16xf32>,
    %26 = vector.extract_strided_slice %9 {offsets = [0, 64], sizes = [16, 16], strides = [1, 1]} : vector<16x128xf32> to vector<16x16xf32>
    %c0_19 = arith.constant 0 : index
    %c4 = arith.constant 4 : index
    %c0_20 = arith.constant 0 : index
    %c0_21 = arith.constant 0 : index
    %27 = vector.load %arg5[%c0_19, %c4, %c0_20, %c0_21] : memref<1x8x16x16xf32, #tpu.memory_space<vmem>>, vector<1x1x16x16xf32>
    %28 = vector.shape_cast %27 : vector<1x1x16x16xf32> to vector<16x16xf32>
    %29 = vector.shape_cast %26 : vector<16x16xf32> to vector<1x1x16x16xf32>
    tpu.vector_store %arg5[%c0_19, %c4, %c0_20, %c0_21], %29 {strides = array<i32>} : memref<1x8x16x16xf32, #tpu.memory_space<vmem>>, vector<1x1x16x16xf32>,
    %30 = vector.extract_strided_slice %9 {offsets = [0, 80], sizes = [16, 16], strides = [1, 1]} : vector<16x128xf32> to vector<16x16xf32>
    %c0_22 = arith.constant 0 : index
    %c5 = arith.constant 5 : index
    %c0_23 = arith.constant 0 : index
    %c0_24 = arith.constant 0 : index
    %31 = vector.load %arg5[%c0_22, %c5, %c0_23, %c0_24] : memref<1x8x16x16xf32, #tpu.memory_space<vmem>>, vector<1x1x16x16xf32>
    %32 = vector.shape_cast %31 : vector<1x1x16x16xf32> to vector<16x16xf32>
    %33 = vector.shape_cast %30 : vector<16x16xf32> to vector<1x1x16x16xf32>
    tpu.vector_store %arg5[%c0_22, %c5, %c0_23, %c0_24], %33 {strides = array<i32>} : memref<1x8x16x16xf32, #tpu.memory_space<vmem>>, vector<1x1x16x16xf32>,
    %34 = vector.extract_strided_slice %9 {offsets = [0, 96], sizes = [16, 16], strides = [1, 1]} : vector<16x128xf32> to vector<16x16xf32>
    %c0_25 = arith.constant 0 : index
    %c6 = arith.constant 6 : index
    %c0_26 = arith.constant 0 : index
    %c0_27 = arith.constant 0 : index
    %35 = vector.load %arg5[%c0_25, %c6, %c0_26, %c0_27] : memref<1x8x16x16xf32, #tpu.memory_space<vmem>>, vector<1x1x16x16xf32>
    %36 = vector.shape_cast %35 : vector<1x1x16x16xf32> to vector<16x16xf32>
    %37 = vector.shape_cast %34 : vector<16x16xf32> to vector<1x1x16x16xf32>
    tpu.vector_store %arg5[%c0_25, %c6, %c0_26, %c0_27], %37 {strides = array<i32>} : memref<1x8x16x16xf32, #tpu.memory_space<vmem>>, vector<1x1x16x16xf32>,
    %38 = vector.extract_strided_slice %9 {offsets = [0, 112], sizes = [16, 16], strides = [1, 1]} : vector<16x128xf32> to vector<16x16xf32>
    %c0_28 = arith.constant 0 : index
    %c7 = arith.constant 7 : index
    %c0_29 = arith.constant 0 : index
    %c0_30 = arith.constant 0 : index
    %39 = vector.load %arg5[%c0_28, %c7, %c0_29, %c0_30] : memref<1x8x16x16xf32, #tpu.memory_space<vmem>>, vector<1x1x16x16xf32>
    %40 = vector.shape_cast %39 : vector<1x1x16x16xf32> to vector<16x16xf32>
    %41 = vector.shape_cast %38 : vector<16x16xf32> to vector<1x1x16x16xf32>
    tpu.vector_store %arg5[%c0_28, %c7, %c0_29, %c0_30], %41 {strides = array<i32>} : memref<1x8x16x16xf32, #tpu.memory_space<vmem>>, vector<1x1x16x16xf32>,
    return
  }
  func.func @transform_0(%arg0: i32, %arg1: i32) -> (i32, i32, i32) {
    %c0_i32 = arith.constant 0 : i32
    %c0_i32_0 = arith.constant 0 : i32
    return %arg0, %arg1, %c0_i32 : i32, i32, i32
  }
  func.func @transform_1(%arg0: i32, %arg1: i32) -> (i32, i32) {
    %c0_i32 = arith.constant 0 : i32
    %c0_i32_0 = arith.constant 0 : i32
    %c0_i32_1 = arith.constant 0 : i32
    return %c0_i32, %c0_i32_0 : i32, i32
  }
  func.func @transform_2(%arg0: i32, %arg1: i32) -> (i32, i32) {
    %c0_i32 = arith.constant 0 : i32
    %c0_i32_0 = arith.constant 0 : i32
    %c0_i32_1 = arith.constant 0 : i32
    return %c0_i32, %c0_i32_0 : i32, i32
  }
  func.func @transform_3(%arg0: i32, %arg1: i32) -> (i32, i32, i32, i32) {
    %c0_i32 = arith.constant 0 : i32
    %c0_i32_0 = arith.constant 0 : i32
    %c0_i32_1 = arith.constant 0 : i32
    return %arg0, %c0_i32, %arg1, %c0_i32_0 : i32, i32, i32, i32
  }
}

</mosaic_0001>

<llo_original>
// kernel: deconv_bnorm_relu_2d.2
$region0: #{deconv_bnorm_relu_2d.2}
  #allocation0 [shape = 'u32[]', space=smem, size = 0x4, offset = 0x4, fixed_abs, tag = 'smem constant byte address 0x4 - core index']
  #allocation1 [shape = 'u32[144,128]{1,0:T(1,128)}', space=vmem, size = 0x12000, scoped, tag = 'internal scratch']
  #allocation2 [shape = 'f32[16,384]{1,0:T(8,128)}', space=vmem, size = 0x6000, scoped, tag = 'scratch operand']
  %s0 = inlined_call_operand.vmem [shape: f32[2,18,128], index: 0, kind: input, shape index: {}]
  %s1 = inlined_call_operand.vmem [shape: f32[384,128], index: 1, kind: input, shape index: {}]
  %s2 = inlined_call_operand.vmem [shape: f32[2,16,128], index: 2, kind: output, shape index: {0}]
  %s3 = inlined_call_operand.vmem [shape: f32[2,1,128], index: 3, kind: output, shape index: {1}]
  %s4 = inlined_call_operand.vmem [shape: f32[2,1,128], index: 4, kind: output, shape index: {2}]
  %5 = xla_tuple %s2, %s3, %s4
  %s6 = sld [smem:[#allocation0]]
  $region57: #{deconv_bnorm_relu_2d.2} parent=0
    _
  %s8 = ssub.s32 1, %s6
  %s9 = scalar_select 0, %s8, %s6
  loop: start=0, step=1, limit=4
  $region2: #{deconv_bnorm_relu_2d.2} parent=0 // loop_pre_header
    _
  $region3: #{deconv_bnorm_relu_2d.2} parent=0 // loop_header
    %s11 = sphi 0, %s15
    %p12 = scmp.ge.s32.totalorder %s11, 4
    %s21 = sphi 0, %s23
    %s24 = sphi 0, %s21
    %s25 = sphi 0, %s24
    %s41 = sphi 0, %s25
    %s45 = sphi 0, %s45
    %s47 = sphi 0, %s45
    %s48 = sphi 0, %s47
    %s62 = sphi 0, %s48
    %s68 = sphi 0, %s70
    %s71 = sphi 0, %s68
    %s72 = sphi 0, %s71
    %s88 = sphi 0, %s72
    %s94 = sphi 0, %s96
    %s97 = sphi 0, %s94
    %s98 = sphi 0, %s97
    %s114 = sphi 0, %s98
    %s120 = sphi 0, %s122
    %s123 = sphi 0, %s120
    %s124 = sphi 0, %s123
    %s140 = sphi 0, %s124
  $region4: #{deconv_bnorm_relu_2d.2} parent=0 // loop_header_branch
    %14 = sbr.rel (%p12) target = $region8
  $region5: #{deconv_bnorm_relu_2d.2} parent=0 // loop_body
    %s16 = ssub.s32 %s11, 1
    %s17 = ssub.s32 %s11, 2
    %s18 = sadd.s32 %s11, 1
    %s19 = ssub.s32 %s11, %s18
    %p20 = scmp.eq.s32.totalorder %s19, 0
    %s22 = sadd.s32 %s21, 1
    %s23 = scalar_select %p20, %s21, %s22
    %p26 = pneg %p20
    %p27 = scmp.eq.s32.totalorder %s11, 1
    %p28 = por %p26, %p27
    %p29 = scmp.ne.s32.totalorder %s21, %s24
    %p30 = scmp.eq.s32.totalorder %s11, 0
    %p31 = por %p29, %p30
    %p32 = scmp.ne.s32.totalorder %s21, %s24
    %p33 = scmp.eq.s32.totalorder %s16, 1
    %p34 = por %p32, %p33
    %p35 = scmp.ne.s32.totalorder %s24, %s25
    %p36 = scmp.eq.s32.totalorder %s16, 0
    %p37 = por %p35, %p36
    %p38 = scmp.ne.s32.totalorder %s24, %s25
    %p39 = scmp.eq.s32.totalorder %s17, 1
    %p40 = por %p38, %p39
    %p42 = scmp.ne.s32.totalorder %s25, %s41
    %p43 = scmp.eq.s32.totalorder %s17, 0
    %p44 = por %p42, %p43
    %s46 = sadd.s32 %s45, 1
    %p49 = scmp.eq.s32.totalorder %s11, 1
    %p50 = scmp.ne.s32.totalorder %s45, %s47
    %p51 = scmp.eq.s32.totalorder %s11, 0
    %p52 = por %p50, %p51
    %p53 = scmp.ne.s32.totalorder %s45, %s47
    %p54 = scmp.eq.s32.totalorder %s16, 1
    %p55 = por %p53, %p54
    %p56 = scmp.ne.s32.totalorder %s47, %s48
    %p57 = scmp.eq.s32.totalorder %s16, 0
    %p58 = por %p56, %p57
    %p59 = scmp.ne.s32.totalorder %s47, %s48
    %p60 = scmp.eq.s32.totalorder %s17, 1
    %p61 = por %p59, %p60
    %p63 = scmp.ne.s32.totalorder %s48, %s62
    %p64 = scmp.eq.s32.totalorder %s17, 0
    %p65 = por %p63, %p64
    %s66 = ssub.s32 %s11, %s18
    %p67 = scmp.eq.s32.totalorder %s66, 0
    %s69 = sadd.s32 %s68, 1
    %s70 = scalar_select %p67, %s68, %s69
    %p73 = pneg %p67
    %p74 = scmp.eq.s32.totalorder %s11, 1
    %p75 = por %p73, %p74
    %p76 = scmp.ne.s32.totalorder %s68, %s71
    %p77 = scmp.eq.s32.totalorder %s11, 0
    %p78 = por %p76, %p77
    %p79 = scmp.ne.s32.totalorder %s68, %s71
    %p80 = scmp.eq.s32.totalorder %s16, 1
    %p81 = por %p79, %p80
    %p82 = scmp.ne.s32.totalorder %s71, %s72
    %p83 = scmp.eq.s32.totalorder %s16, 0
    %p84 = por %p82, %p83
    %p85 = scmp.ne.s32.totalorder %s71, %s72
    %p86 = scmp.eq.s32.totalorder %s17, 1
    %p87 = por %p85, %p86
    %p89 = scmp.ne.s32.totalorder %s72, %s88
    %p90 = scmp.eq.s32.totalorder %s17, 0
    %p91 = por %p89, %p90
    %s92 = ssub.s32 %s11, %s18
    %p93 = scmp.eq.s32.totalorder %s92, 0
    %s95 = sadd.s32 %s94, 1
    %s96 = scalar_select %p93, %s94, %s95
    %p99 = pneg %p93
    %p100 = scmp.eq.s32.totalorder %s11, 1
    %p101 = por %p99, %p100
    %p102 = scmp.ne.s32.totalorder %s94, %s97
    %p103 = scmp.eq.s32.totalorder %s11, 0
    %p104 = por %p102, %p103
    %p105 = scmp.ne.s32.totalorder %s94, %s97
    %p106 = scmp.eq.s32.totalorder %s16, 1
    %p107 = por %p105, %p106
    %p108 = scmp.ne.s32.totalorder %s97, %s98
    %p109 = scmp.eq.s32.totalorder %s16, 0
    %p110 = por %p108, %p109
    %p111 = scmp.ne.s32.totalorder %s97, %s98
    %p112 = scmp.eq.s32.totalorder %s17, 1
    %p113 = por %p111, %p112
    %p115 = scmp.ne.s32.totalorder %s98, %s114
    %p116 = scmp.eq.s32.totalorder %s17, 0
    %p117 = por %p115, %p116
    %s118 = ssub.s32 %s11, %s18
    %p119 = scmp.eq.s32.totalorder %s118, 0
    %s121 = sadd.s32 %s120, 1
    %s122 = scalar_select %p119, %s120, %s121
    %p125 = pneg %p119
    %p126 = scmp.eq.s32.totalorder %s11, 1
    %p127 = por %p125, %p126
    %p128 = scmp.ne.s32.totalorder %s120, %s123
    %p129 = scmp.eq.s32.totalorder %s11, 0
    %p130 = por %p128, %p129
    %p131 = scmp.ne.s32.totalorder %s120, %s123
    %p132 = scmp.eq.s32.totalorder %s16, 1
    %p133 = por %p131, %p132
    %p134 = scmp.ne.s32.totalorder %s123, %s124
    %p135 = scmp.eq.s32.totalorder %s16, 0
    %p136 = por %p134, %p135
    %p137 = scmp.ne.s32.totalorder %s123, %s124
    %p138 = scmp.eq.s32.totalorder %s17, 1
    %p139 = por %p137, %p138
    %p141 = scmp.ne.s32.totalorder %s124, %s140
    %p142 = scmp.eq.s32.totalorder %s17, 0
    %p143 = por %p141, %p142
    %p144 = scmp.le.s32.totalorder 1, %s11
    %p145 = scmp.lt.s32.totalorder %s11, 3
    %p146 = pnand %p144, %p145
    %p147 = pneg %p146
    // Predicated region
    $region9: #{deconv_bnorm_relu_2d.2} parent=5 // pred_check
      _
    $region10: #{deconv_bnorm_relu_2d.2} parent=5 // pred_check_branch
      %149 = sbr.rel (%p146) target = $region12
    $region11: #{deconv_bnorm_relu_2d.2} parent=5 // pred_region
      %s150 = ssub.s32 %s11, 1
      // Predicated region
      $region13: #{deconv_bnorm_relu_2d.2} parent=11 // pred_check
        %p151 = pneg %p58
      $region14: #{deconv_bnorm_relu_2d.2} parent=11 // pred_check_branch
        %153 = sbr.rel (%p151) target = $region16
      $region15: #{deconv_bnorm_relu_2d.2} parent=11 // pred_region
        _
      $region16: #{deconv_bnorm_relu_2d.2} parent=11 // pred_fallthru
        _
    $region12: #{deconv_bnorm_relu_2d.2} parent=5 // pred_fallthru
      _
    %p154 = scmp.lt.s32.totalorder %s11, 2
    // Predicated region
    $region17: #{deconv_bnorm_relu_2d.2} parent=5 // pred_check
      %p155 = pneg %p154
    $region18: #{deconv_bnorm_relu_2d.2} parent=5 // pred_check_branch
      %157 = sbr.rel (%p155) target = $region20
    $region19: #{deconv_bnorm_relu_2d.2} parent=5 // pred_region
      // Predicated region
      $region21: #{deconv_bnorm_relu_2d.2} parent=19 // pred_check
        %p158 = pneg %p31
      $region22: #{deconv_bnorm_relu_2d.2} parent=19 // pred_check_branch
        %160 = sbr.rel (%p158) target = $region24
      $region23: #{deconv_bnorm_relu_2d.2} parent=19 // pred_region
        %p161 = scmp.lt.s32.totalorder %s11, 1
        %s162 = scalar_select %p161, %s11, 1
        %s163 = smul.addr %s162, 3
        %s164 = smul.addr %s163, 8
        %s165 = scalar_lea.vmem %s0, %s164
      $region24: #{deconv_bnorm_relu_2d.2} parent=19 // pred_fallthru
        _
    $region20: #{deconv_bnorm_relu_2d.2} parent=5 // pred_fallthru
      _
    %p166 = scmp.le.s32.totalorder 1, %s11
    %p167 = scmp.lt.s32.totalorder %s11, 3
    %p168 = pnand %p166, %p167
    %p169 = pneg %p168
    // Predicated region
    $region25: #{deconv_bnorm_relu_2d.2} parent=5 // pred_check
      _
    $region26: #{deconv_bnorm_relu_2d.2} parent=5 // pred_check_branch
      %171 = sbr.rel (%p168) target = $region28
    $region27: #{deconv_bnorm_relu_2d.2} parent=5 // pred_region
      %s172 = ssub.s32 %s11, 1
      %p173 = scmp.lt.s32.totalorder %s16, 1
      %s174 = scalar_select %p173, %s16, 1
      %s175 = smul.addr %s174, 3
      %s176 = smul.addr %s175, 8
      %s177 = scalar_lea.vmem %s0, %s176
      %p178 = pneg %p37
      %p179 = pneg %p34
      %p180 = pneg %p58
      %p181 = pneg %p55
      %p182 = pneg %p84
      %p183 = pneg %p81
      %p184 = scmp.lt.s32.totalorder %s16, 1
      %s185 = scalar_select %p184, %s16, 1
      %s186 = smul.addr %s185, 2
      %s187 = smul.addr %s186, 8
      %s188 = scalar_lea.vmem %s2, %s187
      %p189 = pneg %p110
      %p190 = pneg %p107
      %p191 = scmp.lt.s32.totalorder %s16, 1
      %s192 = scalar_select %p191, %s16, 1
      %s193 = scalar_lea.vmem %s3, %s192
      %p194 = pneg %p136
      %p195 = pneg %p133
      %p196 = scmp.lt.s32.totalorder %s16, 1
      %s197 = scalar_select %p196, %s16, 1
      %s198 = scalar_lea.vmem %s4, %s197
      %p199 = scmp.lt.s32.totalorder %s16, 1
      %s200 = scalar_select %p199, %s16, 1
      %s201 = smul.addr %s200, 3
      %s202 = smul.addr %s201, 8
      %s203 = scalar_lea.vmem %s0, %s202
      %p204 = scmp.lt.s32.totalorder %s16, 1
      %s205 = scalar_select %p204, %s16, 1
      %s206 = smul.addr %s205, 2
      %s207 = smul.addr %s206, 8
      %s208 = scalar_lea.vmem %s2, %s207
      %p209 = scmp.lt.s32.totalorder %s16, 1
      %s210 = scalar_select %p209, %s16, 1
      %s211 = scalar_lea.vmem %s3, %s210
      %p212 = scmp.lt.s32.totalorder %s16, 1
      %s213 = scalar_select %p212, %s16, 1
      %s214 = scalar_lea.vmem %s4, %s213
      %v215 = vld [vmem:[%s203] sm:$0xff]
      %v216 = vld [vmem:[%s203 + $0x8] sm:$0xff]
      %v217 = vld [vmem:[%s203 + $0x10] sm:$0x3]
      %218 = vst [vmem:[#allocation2] sm:$0xff] %v215
      %219 = vst [vmem:[#allocation2 + $0x18] sm:$0xff] %v216
      %vm223 = vcmask 1046528
      %v224 = vrot.slane %v215, 1
      %v225 = vrot.slane %v216, 1
      %v226 = vsel %vm223, %v224, %v225
      %v227 = vrot.slane %v217, 1
      %v228 = vsel %vm223, %v225, %v227
      %231 = vst [vmem:[#allocation2 + $0x8] sm:$0xff] %v226
      %232 = vst [vmem:[#allocation2 + $0x20] sm:$0xff] %v228
      %vm233 = vcmask 1045504
      %v234 = vrot.slane %v215, 2
      %v235 = vrot.slane %v216, 2
      %v236 = vsel %vm233, %v234, %v235
      %v237 = vrot.slane %v217, 2
      %v238 = vsel %vm233, %v235, %v237
      %241 = vst [vmem:[#allocation2 + $0x10] sm:$0xff] %v236
      %242 = vst [vmem:[#allocation2 + $0x28] sm:$0xff] %v238
      %v243 = vld [vmem:[#allocation2] sm:$0xff]
      %v244 = vld [vmem:[#allocation2 + $0x8] sm:$0xff]
      %v245 = vld [vmem:[#allocation2 + $0x10] sm:$0xff]
      %v246 = vld [vmem:[#allocation2 + $0x18] sm:$0xff]
      %v247 = vld [vmem:[#allocation2 + $0x20] sm:$0xff]
      %v248 = vld [vmem:[#allocation2 + $0x28] sm:$0xff]
      %v249 = vld [vmem:[%s1] sm:$0xff]
      %v250 = vld [vmem:[%s1 + $0x8] sm:$0xff]
      %v251 = vld [vmem:[%s1 + $0x10] sm:$0xff]
      %v252 = vld [vmem:[%s1 + $0x18] sm:$0xff]
      %v253 = vld [vmem:[%s1 + $0x20] sm:$0xff]
      %v254 = vld [vmem:[%s1 + $0x28] sm:$0xff]
      %v255 = vld [vmem:[%s1 + $0x30] sm:$0xff]
      %v256 = vld [vmem:[%s1 + $0x38] sm:$0xff]
      %v257 = vld [vmem:[%s1 + $0x40] sm:$0xff]
      %v258 = vld [vmem:[%s1 + $0x48] sm:$0xff]
      %v259 = vld [vmem:[%s1 + $0x50] sm:$0xff]
      %v260 = vld [vmem:[%s1 + $0x58] sm:$0xff]
      %v261 = vld [vmem:[%s1 + $0x60] sm:$0xff]
      %v262 = vld [vmem:[%s1 + $0x68] sm:$0xff]
      %v263 = vld [vmem:[%s1 + $0x70] sm:$0xff]
      %v264 = vld [vmem:[%s1 + $0x78] sm:$0xff]
      %v265 = vld [vmem:[%s1 + $0x80] sm:$0xff]
      %v266 = vld [vmem:[%s1 + $0x88] sm:$0xff]
      %v267 = vld [vmem:[%s1 + $0x90] sm:$0xff]
      %v268 = vld [vmem:[%s1 + $0x98] sm:$0xff]
      %v269 = vld [vmem:[%s1 + $0xa0] sm:$0xff]
      %v270 = vld [vmem:[%s1 + $0xa8] sm:$0xff]
      %v271 = vld [vmem:[%s1 + $0xb0] sm:$0xff]
      %v272 = vld [vmem:[%s1 + $0xb8] sm:$0xff]
      %v273 = vld [vmem:[%s1 + $0xc0] sm:$0xff]
      %v274 = vld [vmem:[%s1 + $0xc8] sm:$0xff]
      %v275 = vld [vmem:[%s1 + $0xd0] sm:$0xff]
      %v276 = vld [vmem:[%s1 + $0xd8] sm:$0xff]
      %v277 = vld [vmem:[%s1 + $0xe0] sm:$0xff]
      %v278 = vld [vmem:[%s1 + $0xe8] sm:$0xff]
      %v279 = vld [vmem:[%s1 + $0xf0] sm:$0xff]
      %v280 = vld [vmem:[%s1 + $0xf8] sm:$0xff]
      %v281 = vld [vmem:[%s1 + $0x100] sm:$0xff]
      %v282 = vld [vmem:[%s1 + $0x108] sm:$0xff]
      %v283 = vld [vmem:[%s1 + $0x110] sm:$0xff]
      %v284 = vld [vmem:[%s1 + $0x118] sm:$0xff]
      %v285 = vld [vmem:[%s1 + $0x120] sm:$0xff]
      %v286 = vld [vmem:[%s1 + $0x128] sm:$0xff]
      %v287 = vld [vmem:[%s1 + $0x130] sm:$0xff]
      %v288 = vld [vmem:[%s1 + $0x138] sm:$0xff]
      %v289 = vld [vmem:[%s1 + $0x140] sm:$0xff]
      %v290 = vld [vmem:[%s1 + $0x148] sm:$0xff]
      %v291 = vld [vmem:[%s1 + $0x150] sm:$0xff]
      %v292 = vld [vmem:[%s1 + $0x158] sm:$0xff]
      %v293 = vld [vmem:[%s1 + $0x160] sm:$0xff]
      %v294 = vld [vmem:[%s1 + $0x168] sm:$0xff]
      %v295 = vld [vmem:[%s1 + $0x170] sm:$0xff]
      %v296 = vld [vmem:[%s1 + $0x178] sm:$0xff]
      %297 = vmatprep.subr.mxu0 0.0
      %298 = vmatpush1.msra.mxu0 %v249
      %299 = vmatprep.subr.mxu0 0.0
      %300 = vmatpush1.msra.mxu0 %v250
      %301 = vmatprep.subr.mxu0 0.0
      %302 = vmatpush1.msra.mxu0 %v251
      %303 = vmatprep.subr.mxu0 0.0
      %304 = vmatpush1.msra.mxu0 %v252
      %305 = vmatprep.subr.mxu0 0.0
      %306 = vmatpush1.msra.mxu0 %v253
      %307 = vmatprep.subr.mxu0 0.0
      %308 = vmatpush1.msra.mxu0 %v254
      %309 = vmatprep.subr.mxu0 0.0
      %310 = vmatpush1.msra.mxu0 %v255
      %311 = vmatprep.subr.mxu0 0.0
      %312 = vmatpush1.msra.mxu0 %v256
      %313 = vmatprep.subr.mxu0 0.0
      %314 = vmatpush1.msra.mxu0 %v257
      %315 = vmatprep.subr.mxu0 0.0
      %316 = vmatpush1.msra.mxu0 %v258
      %317 = vmatprep.subr.mxu0 0.0
      %318 = vmatpush1.msra.mxu0 %v259
      %319 = vmatprep.subr.mxu0 0.0
      %320 = vmatpush1.msra.mxu0 %v260
      %321 = vmatprep.subr.mxu0 0.0
      %322 = vmatpush1.msra.mxu0 %v261
      %323 = vmatprep.subr.mxu0 0.0
      %324 = vmatpush1.msra.mxu0 %v262
      %325 = vmatprep.subr.mxu0 0.0
      %326 = vmatpush1.msra.mxu0 %v263
      %327 = vmatprep.subr.mxu0 0.0
      %328 = vmatpush1.msra.mxu0 %v264
      %329 = vmatprep.subr.mxu0 0.0
      %330 = vmatpush1.msra.mxu0 %v265
      %331 = vmatprep.subr.mxu0 0.0
      %332 = vmatpush1.msra.mxu0 %v266
      %333 = vmatprep.subr.mxu0 0.0
      %334 = vmatpush1.msra.mxu0 %v267
      %335 = vmatprep.subr.mxu0 0.0
      %336 = vmatpush1.msra.mxu0 %v268
      %337 = vmatprep.subr.mxu0 0.0
      %338 = vmatpush1.msra.mxu0 %v269
      %339 = vmatprep.subr.mxu0 0.0
      %340 = vmatpush1.msra.mxu0 %v270
      %341 = vmatprep.subr.mxu0 0.0
      %342 = vmatpush1.msra.mxu0 %v271
      %343 = vmatprep.subr.mxu0 0.0
      %344 = vmatpush1.msra.mxu0 %v272
      %345 = vmatprep.subr.mxu0 0.0
      %346 = vmatpush1.msra.mxu0 %v273
      %347 = vmatprep.subr.mxu0 0.0
      %348 = vmatpush1.msra.mxu0 %v274
      %349 = vmatprep.subr.mxu0 0.0
      %350 = vmatpush1.msra.mxu0 %v275
      %351 = vmatprep.subr.mxu0 0.0
      %352 = vmatpush1.msra.mxu0 %v276
      %353 = vmatprep.subr.mxu0 0.0
      %354 = vmatpush1.msra.mxu0 %v277
      %355 = vmatprep.subr.mxu0 0.0
      %356 = vmatpush1.msra.mxu0 %v278
      %357 = vmatprep.subr.mxu0 0.0
      %358 = vmatpush1.msra.mxu0 %v279
      %359 = vmatprep.subr.mxu0 0.0
      %360 = vmatpush1.msra.mxu0 %v280
      %361 = vmatprep.mubr.f32.mxu0 %v244
      %362 = vmatmul.mubr.f32.gmra.mrb[0].mxu0 %v243
      %v363 = vpop.f32.mrb[0].mxu0
      %v364 = vadd.f32 0.0, %v363
      %v365 = vpop.f32.mrb[0].mxu0
      %366 = vmatprep.mubr.f32.mxu0 %v247
      %367 = vmatmul.mubr.f32.gmra.mrb[0].mxu0 %v246
      %v368 = vpop.f32.mrb[0].mxu0
      %v369 = vadd.f32 0.0, %v368
      %v370 = vpop.f32.mrb[0].mxu0
      %371 = vdwg.mxu0
      %372 = vmatprep.subr.mxu0 0.0
      %373 = vmatpush1.msra.mxu0 %v281
      %374 = vmatprep.subr.mxu0 0.0
      %375 = vmatpush1.msra.mxu0 %v282
      %376 = vmatprep.subr.mxu0 0.0
      %377 = vmatpush1.msra.mxu0 %v283
      %378 = vmatprep.subr.mxu0 0.0
      %379 = vmatpush1.msra.mxu0 %v284
      %380 = vmatprep.subr.mxu0 0.0
      %381 = vmatpush1.msra.mxu0 %v285
      %382 = vmatprep.subr.mxu0 0.0
      %383 = vmatpush1.msra.mxu0 %v286
      %384 = vmatprep.subr.mxu0 0.0
      %385 = vmatpush1.msra.mxu0 %v287
      %386 = vmatprep.subr.mxu0 0.0
      %387 = vmatpush1.msra.mxu0 %v288
      %388 = vmatprep.subr.mxu0 0.0
      %389 = vmatpush1.msra.mxu0 %v289
      %390 = vmatprep.subr.mxu0 0.0
      %391 = vmatpush1.msra.mxu0 %v290
      %392 = vmatprep.subr.mxu0 0.0
      %393 = vmatpush1.msra.mxu0 %v291
      %394 = vmatprep.subr.mxu0 0.0
      %395 = vmatpush1.msra.mxu0 %v292
      %396 = vmatprep.subr.mxu0 0.0
      %397 = vmatpush1.msra.mxu0 %v293
      %398 = vmatprep.subr.mxu0 0.0
      %399 = vmatpush1.msra.mxu0 %v294
      %400 = vmatprep.subr.mxu0 0.0
      %401 = vmatpush1.msra.mxu0 %v295
      %402 = vmatprep.subr.mxu0 0.0
      %403 = vmatpush1.msra.mxu0 %v296
      %404 = vmatprep.subr.mxu0 0.0
      %405 = vmatpush1.msra.mxu0 0.0
      %406 = vmatprep.subr.mxu0 0.0
      %407 = vmatpush1.msra.mxu0 0.0
      %408 = vmatprep.subr.mxu0 0.0
      %409 = vmatpush1.msra.mxu0 0.0
      %410 = vmatprep.subr.mxu0 0.0
      %411 = vmatpush1.msra.mxu0 0.0
      %412 = vmatprep.subr.mxu0 0.0
      %413 = vmatpush1.msra.mxu0 0.0
      %414 = vmatprep.subr.mxu0 0.0
      %415 = vmatpush1.msra.mxu0 0.0
      %416 = vmatprep.subr.mxu0 0.0
      %417 = vmatpush1.msra.mxu0 0.0
      %418 = vmatprep.subr.mxu0 0.0
      %419 = vmatpush1.msra.mxu0 0.0
      %420 = vmatprep.subr.mxu0 0.0
      %421 = vmatpush1.msra.mxu0 0.0
      %422 = vmatprep.subr.mxu0 0.0
      %423 = vmatpush1.msra.mxu0 0.0
      %424 = vmatprep.subr.mxu0 0.0
      %425 = vmatpush1.msra.mxu0 0.0
      %426 = vmatprep.subr.mxu0 0.0
      %427 = vmatpush1.msra.mxu0 0.0
      %428 = vmatprep.subr.mxu0 0.0
      %429 = vmatpush1.msra.mxu0 0.0
      %430 = vmatprep.subr.mxu0 0.0
      %431 = vmatpush1.msra.mxu0 0.0
      %432 = vmatprep.subr.mxu0 0.0
      %433 = vmatpush1.msra.mxu0 0.0
      %434 = vmatprep.subr.mxu0 0.0
      %435 = vmatpush1.msra.mxu0 0.0
      %436 = vmatprep.mubr.f32.mxu0 0.0
      %437 = vmatmul.mubr.f32.gmra.mrb[0].mxu0 %v245
      %v438 = vpop.f32.mrb[0].mxu0
      %v439 = vadd.f32 %v364, %v438
      %v440 = vpop.f32.mrb[0].mxu0
      %441 = vmatprep.mubr.f32.mxu0 0.0
      %442 = vmatmul.mubr.f32.gmra.mrb[0].mxu0 %v248
      %v443 = vpop.f32.mrb[0].mxu0
      %v444 = vadd.f32 %v369, %v443
      %v445 = vpop.f32.mrb[0].mxu0
      %446 = vdwg.mxu0
      %447 = vst [vmem:[%s208] sm:$0xff] %v439
      %448 = vst [vmem:[%s208 + $0x8] sm:$0xff] %v444
      %v449 = vadd.f32 %v439, %v444
      %v450 = vrot.slane %v449, 4
      %v451 = vadd.f32 %v449, %v450
      %v452 = vrot.slane %v451, 2
      %v453 = vadd.f32 %v451, %v452
      %v454 = vrot.slane %v453, 1
      %v455 = vadd.f32 %v453, %v454
      %456 = vst [vmem:[%s211] sm:$0x1] %v455
      %v457 = vmul.f32 %v439, %v439
      %v458 = vmul.f32 %v444, %v444
      %v459 = vadd.f32 %v457, %v458
      %v460 = vrot.slane %v459, 4
      %v461 = vadd.f32 %v459, %v460
      %v462 = vrot.slane %v461, 2
      %v463 = vadd.f32 %v461, %v462
      %v464 = vrot.slane %v463, 1
      %v465 = vadd.f32 %v463, %v464
      %466 = vst [vmem:[%s214] sm:$0x1] %v465
      %p467 = scmp.lt.s32.totalorder %s16, 1
      %s468 = scalar_select %p467, %s16, 1
      %s469 = smul.addr %s468, 2
      %s470 = smul.addr %s469, 8
      %s471 = scalar_lea.vmem %s2, %s470
      %p472 = scmp.lt.s32.totalorder %s16, 1
      %s473 = scalar_select %p472, %s16, 1
      %s474 = scalar_lea.vmem %s3, %s473
      %p475 = scmp.lt.s32.totalorder %s16, 1
      %s476 = scalar_select %p475, %s16, 1
      %s477 = scalar_lea.vmem %s4, %s476
      // Predicated region
      $region29: #{deconv_bnorm_relu_2d.2} parent=27 // pred_check
        %p478 = pneg %p81
      $region30: #{deconv_bnorm_relu_2d.2} parent=27 // pred_check_branch
        %480 = sbr.rel (%p478) target = $region32
      $region31: #{deconv_bnorm_relu_2d.2} parent=27 // pred_region
        _
      $region32: #{deconv_bnorm_relu_2d.2} parent=27 // pred_fallthru
        _
      // Predicated region
      $region33: #{deconv_bnorm_relu_2d.2} parent=27 // pred_check
        %p481 = pneg %p107
      $region34: #{deconv_bnorm_relu_2d.2} parent=27 // pred_check_branch
        %483 = sbr.rel (%p481) target = $region36
      $region35: #{deconv_bnorm_relu_2d.2} parent=27 // pred_region
        _
      $region36: #{deconv_bnorm_relu_2d.2} parent=27 // pred_fallthru
        _
      // Predicated region
      $region37: #{deconv_bnorm_relu_2d.2} parent=27 // pred_check
        %p484 = pneg %p133
      $region38: #{deconv_bnorm_relu_2d.2} parent=27 // pred_check_branch
        %486 = sbr.rel (%p484) target = $region40
      $region39: #{deconv_bnorm_relu_2d.2} parent=27 // pred_region
        _
      $region40: #{deconv_bnorm_relu_2d.2} parent=27 // pred_fallthru
        _
    $region28: #{deconv_bnorm_relu_2d.2} parent=5 // pred_fallthru
      _
    %p487 = scmp.le.s32.totalorder 2, %s11
    // Predicated region
    $region41: #{deconv_bnorm_relu_2d.2} parent=5 // pred_check
      %p488 = pneg %p487
    $region42: #{deconv_bnorm_relu_2d.2} parent=5 // pred_check_branch
      %490 = sbr.rel (%p488) target = $region44
    $region43: #{deconv_bnorm_relu_2d.2} parent=5 // pred_region
      %s491 = ssub.s32 %s11, 2
      // Predicated region
      $region45: #{deconv_bnorm_relu_2d.2} parent=43 // pred_check
        %p492 = pneg %p87
      $region46: #{deconv_bnorm_relu_2d.2} parent=43 // pred_check_branch
        %494 = sbr.rel (%p492) target = $region48
      $region47: #{deconv_bnorm_relu_2d.2} parent=43 // pred_region
        %p495 = scmp.lt.s32.totalorder %s17, 1
        %s496 = scalar_select %p495, %s17, 1
        %s497 = smul.addr %s496, 2
        %s498 = smul.addr %s497, 8
        %s499 = scalar_lea.vmem %s2, %s498
      $region48: #{deconv_bnorm_relu_2d.2} parent=43 // pred_fallthru
        _
      // Predicated region
      $region49: #{deconv_bnorm_relu_2d.2} parent=43 // pred_check
        %p500 = pneg %p113
      $region50: #{deconv_bnorm_relu_2d.2} parent=43 // pred_check_branch
        %502 = sbr.rel (%p500) target = $region52
      $region51: #{deconv_bnorm_relu_2d.2} parent=43 // pred_region
        %p503 = scmp.lt.s32.totalorder %s17, 1
        %s504 = scalar_select %p503, %s17, 1
        %s505 = scalar_lea.vmem %s3, %s504
      $region52: #{deconv_bnorm_relu_2d.2} parent=43 // pred_fallthru
        _
      // Predicated region
      $region53: #{deconv_bnorm_relu_2d.2} parent=43 // pred_check
        %p506 = pneg %p139
      $region54: #{deconv_bnorm_relu_2d.2} parent=43 // pred_check_branch
        %508 = sbr.rel (%p506) target = $region56
      $region55: #{deconv_bnorm_relu_2d.2} parent=43 // pred_region
        %p509 = scmp.lt.s32.totalorder %s17, 1
        %s510 = scalar_select %p509, %s17, 1
        %s511 = scalar_lea.vmem %s4, %s510
      $region56: #{deconv_bnorm_relu_2d.2} parent=43 // pred_fallthru
        _
    $region44: #{deconv_bnorm_relu_2d.2} parent=5 // pred_fallthru
      _
  $region6: #{deconv_bnorm_relu_2d.2} parent=0 // loop_footer
    %s15 = sadd.s32 1, %s11
  $region7: #{deconv_bnorm_relu_2d.2} parent=0 // loop_footer_branch
    %10 = sbr.rel target = $region3
  $region8: #{deconv_bnorm_relu_2d.2} parent=0 // loop_exit
    _

// kernel: deconv_bnorm_relu_2d.3
$region0: #{deconv_bnorm_relu_2d.3}
  #allocation0 [shape = 'u32[]', space=smem, size = 0x4, offset = 0x4, fixed_abs, tag = 'smem constant byte address 0x4 - core index']
  #allocation1 [shape = 'u32[144,128]{1,0:T(1,128)}', space=vmem, size = 0x12000, scoped, tag = 'internal scratch']
  %s0 = inlined_call_operand.vmem [shape: f32[2,16,128], index: 0, kind: input, shape index: {}]
  %s1 = inlined_call_operand.vmem [shape: f32[1,128], index: 1, kind: input, shape index: {}]
  %s2 = inlined_call_operand.vmem [shape: f32[1,128], index: 2, kind: input, shape index: {}]
  %s3 = inlined_call_operand.hbm [shape: f32[2,8,16,16], index: 3, kind: output, shape index: {}]
  %s4 = sld [smem:[#allocation0]]
  $region45: #{deconv_bnorm_relu_2d.3} parent=0
    _
  %s6 = ssub.s32 1, %s4
  %s7 = scalar_select 0, %s6, %s4
  $region1: #{deconv_bnorm_relu_2d.3} parent=0
    #allocation2 [shape = 'u8[131072]{0}', space=vmem, size = 0x20000, scoped, tag = 'output window, operand 0']
    #allocation3 [shape = 's32[2]{0}', space=sflag, size = 0x8, scoped, tag = 'scoped memory for deconv_bnorm_relu_2d.3']
    %8 = vsyncpa [#allocation3], 0
    %s9 = scalar_lea.sflag [#allocation3], 1
    %10 = vsyncpa %s9, 0
    loop: start=0, step=1, limit=4
    $region2: #{deconv_bnorm_relu_2d.3} parent=1 // loop_pre_header
      _
    $region3: #{deconv_bnorm_relu_2d.3} parent=1 // loop_header
      %s12 = sphi 0, %s16
      %p13 = scmp.ge.s32.totalorder %s12, 4
      %s19 = sphi 0, %s31
      %s20 = sphi 0, %s27
      %s21 = sphi 0, %s19
      %s22 = sphi 0, %s20
      %s23 = sphi 0, %s21
      %s24 = sphi 0, %s22
      %s36 = sphi 0, %s38
      %s39 = sphi 0, %s36
      %s40 = sphi 0, %s39
      %s56 = sphi 0, %s40
      %s60 = sphi 0, %s60
      %s62 = sphi 0, %s60
      %s63 = sphi 0, %s62
      %s77 = sphi 0, %s63
      %s81 = sphi 0, %s81
      %s83 = sphi 0, %s81
      %s84 = sphi 0, %s83
      %s98 = sphi 0, %s84
      %s106 = sphi 0, %s108
      %s109 = sphi 0, %s106
      %s110 = sphi 0, %s109
      %s126 = sphi 0, %s110
    $region4: #{deconv_bnorm_relu_2d.3} parent=1 // loop_header_branch
      %15 = sbr.rel (%p13) target = $region8
    $region5: #{deconv_bnorm_relu_2d.3} parent=1 // loop_body
      %s17 = ssub.s32 %s12, 1
      %s18 = ssub.s32 %s12, 2
      %s25 = sadd.s32 1, %s20
      %p26 = scmp.ge.s32.totalorder %s25, 1
      %s27 = scalar_select %p26, 0, %s25
      %s28 = sadd.s32 1, %s19
      %s29 = scalar_select %p26, %s28, %s19
      %p30 = scmp.ge.s32.totalorder %s29, 2
      %s31 = scalar_select %p30, 0, %s29
      %s32 = ssub.s32 %s19, %s31
      %s33 = ssub.s32 %s20, %s27
      %s34 = sor.u32 %s32, %s33
      %p35 = scmp.eq.s32.totalorder %s34, 0
      %s37 = sadd.s32 %s36, 1
      %s38 = scalar_select %p35, %s36, %s37
      %p41 = pneg %p35
      %p42 = scmp.eq.s32.totalorder %s12, 1
      %p43 = por %p41, %p42
      %p44 = scmp.ne.s32.totalorder %s36, %s39
      %p45 = scmp.eq.s32.totalorder %s12, 0
      %p46 = por %p44, %p45
      %p47 = scmp.ne.s32.totalorder %s36, %s39
      %p48 = scmp.eq.s32.totalorder %s17, 1
      %p49 = por %p47, %p48
      %p50 = scmp.ne.s32.totalorder %s39, %s40
      %p51 = scmp.eq.s32.totalorder %s17, 0
      %p52 = por %p50, %p51
      %p53 = scmp.ne.s32.totalorder %s39, %s40
      %p54 = scmp.eq.s32.totalorder %s18, 1
      %p55 = por %p53, %p54
      %p57 = scmp.ne.s32.totalorder %s40, %s56
      %p58 = scmp.eq.s32.totalorder %s18, 0
      %p59 = por %p57, %p58
      %s61 = sadd.s32 %s60, 1
      %p64 = scmp.eq.s32.totalorder %s12, 1
      %p65 = scmp.ne.s32.totalorder %s60, %s62
      %p66 = scmp.eq.s32.totalorder %s12, 0
      %p67 = por %p65, %p66
      %p68 = scmp.ne.s32.totalorder %s60, %s62
      %p69 = scmp.eq.s32.totalorder %s17, 1
      %p70 = por %p68, %p69
      %p71 = scmp.ne.s32.totalorder %s62, %s63
      %p72 = scmp.eq.s32.totalorder %s17, 0
      %p73 = por %p71, %p72
      %p74 = scmp.ne.s32.totalorder %s62, %s63
      %p75 = scmp.eq.s32.totalorder %s18, 1
      %p76 = por %p74, %p75
      %p78 = scmp.ne.s32.totalorder %s63, %s77
      %p79 = scmp.eq.s32.totalorder %s18, 0
      %p80 = por %p78, %p79
      %s82 = sadd.s32 %s81, 1
      %p85 = scmp.eq.s32.totalorder %s12, 1
      %p86 = scmp.ne.s32.totalorder %s81, %s83
      %p87 = scmp.eq.s32.totalorder %s12, 0
      %p88 = por %p86, %p87
      %p89 = scmp.ne.s32.totalorder %s81, %s83
      %p90 = scmp.eq.s32.totalorder %s17, 1
      %p91 = por %p89, %p90
      %p92 = scmp.ne.s32.totalorder %s83, %s84
      %p93 = scmp.eq.s32.totalorder %s17, 0
      %p94 = por %p92, %p93
      %p95 = scmp.ne.s32.totalorder %s83, %s84
      %p96 = scmp.eq.s32.totalorder %s18, 1
      %p97 = por %p95, %p96
      %p99 = scmp.ne.s32.totalorder %s84, %s98
      %p100 = scmp.eq.s32.totalorder %s18, 0
      %p101 = por %p99, %p100
      %s102 = ssub.s32 %s19, %s31
      %s103 = ssub.s32 %s20, %s27
      %s104 = sor.u32 %s102, %s103
      %p105 = scmp.eq.s32.totalorder %s104, 0
      %s107 = sadd.s32 %s106, 1
      %s108 = scalar_select %p105, %s106, %s107
      %p111 = pneg %p105
      %p112 = scmp.eq.s32.totalorder %s12, 1
      %p113 = por %p111, %p112
      %p114 = scmp.ne.s32.totalorder %s106, %s109
      %p115 = scmp.eq.s32.totalorder %s12, 0
      %p116 = por %p114, %p115
      %p117 = scmp.ne.s32.totalorder %s106, %s109
      %p118 = scmp.eq.s32.totalorder %s17, 1
      %p119 = por %p117, %p118
      %p120 = scmp.ne.s32.totalorder %s109, %s110
      %p121 = scmp.eq.s32.totalorder %s17, 0
      %p122 = por %p120, %p121
      %p123 = scmp.ne.s32.totalorder %s109, %s110
      %p124 = scmp.eq.s32.totalorder %s18, 1
      %p125 = por %p123, %p124
      %p127 = scmp.ne.s32.totalorder %s110, %s126
      %p128 = scmp.eq.s32.totalorder %s18, 0
      %p129 = por %p127, %p128
      %p130 = scmp.le.s32.totalorder 1, %s12
      %p131 = scmp.lt.s32.totalorder %s12, 3
      %p132 = pnand %p130, %p131
      %p133 = pneg %p132
      // Predicated region
      $region9: #{deconv_bnorm_relu_2d.3} parent=5 // pred_check
        _
      $region10: #{deconv_bnorm_relu_2d.3} parent=5 // pred_check_branch
        %135 = sbr.rel (%p132) target = $region12
      $region11: #{deconv_bnorm_relu_2d.3} parent=5 // pred_region
        %s136 = ssub.s32 %s12, 1
        // Predicated region
        $region13: #{deconv_bnorm_relu_2d.3} parent=11 // pred_check
          %p137 = pneg %p73
        $region14: #{deconv_bnorm_relu_2d.3} parent=11 // pred_check_branch
          %139 = sbr.rel (%p137) target = $region16
        $region15: #{deconv_bnorm_relu_2d.3} parent=11 // pred_region
          _
        $region16: #{deconv_bnorm_relu_2d.3} parent=11 // pred_fallthru
          _
        // Predicated region
        $region17: #{deconv_bnorm_relu_2d.3} parent=11 // pred_check
          %p140 = pneg %p94
        $region18: #{deconv_bnorm_relu_2d.3} parent=11 // pred_check_branch
          %142 = sbr.rel (%p140) target = $region20
        $region19: #{deconv_bnorm_relu_2d.3} parent=11 // pred_region
          _
        $region20: #{deconv_bnorm_relu_2d.3} parent=11 // pred_fallthru
          _
      $region12: #{deconv_bnorm_relu_2d.3} parent=5 // pred_fallthru
        _
      %p143 = scmp.lt.s32.totalorder %s12, 2
      // Predicated region
      $region21: #{deconv_bnorm_relu_2d.3} parent=5 // pred_check
        %p144 = pneg %p143
      $region22: #{deconv_bnorm_relu_2d.3} parent=5 // pred_check_branch
        %146 = sbr.rel (%p144) target = $region24
      $region23: #{deconv_bnorm_relu_2d.3} parent=5 // pred_region
        // Predicated region
        $region25: #{deconv_bnorm_relu_2d.3} parent=23 // pred_check
          %p147 = pneg %p46
        $region26: #{deconv_bnorm_relu_2d.3} parent=23 // pred_check_branch
          %149 = sbr.rel (%p147) target = $region28
        $region27: #{deconv_bnorm_relu_2d.3} parent=23 // pred_region
          %s150 = smul.u32 2, %s20
          %p151 = scmp.lt.s32.totalorder %s19, 1
          %s152 = scalar_select %p151, %s19, 1
          %p153 = scmp.lt.s32.totalorder %s150, 1
          %s154 = scalar_select %p153, %s150, 1
          %s155 = smul.addr %s152, 2
          %s156 = sadd.s32 %s154, %s155
          %s157 = smul.addr %s156, 8
          %s158 = scalar_lea.vmem %s0, %s157
          %s159 = smul.u32 2, %s20
        $region28: #{deconv_bnorm_relu_2d.3} parent=23 // pred_fallthru
          _
      $region24: #{deconv_bnorm_relu_2d.3} parent=5 // pred_fallthru
        _
      %p160 = scmp.le.s32.totalorder 1, %s12
      %p161 = scmp.lt.s32.totalorder %s12, 3
      %p162 = pnand %p160, %p161
      %p163 = pneg %p162
      // Predicated region
      $region29: #{deconv_bnorm_relu_2d.3} parent=5 // pred_check
        _
      $region30: #{deconv_bnorm_relu_2d.3} parent=5 // pred_check_branch
        %165 = sbr.rel (%p162) target = $region32
      $region31: #{deconv_bnorm_relu_2d.3} parent=5 // pred_region
        %s166 = ssub.s32 %s12, 1
        %s167 = smul.u32 2, %s22
        %p168 = scmp.lt.s32.totalorder %s21, 1
        %s169 = scalar_select %p168, %s21, 1
        %p170 = scmp.lt.s32.totalorder %s167, 1
        %s171 = scalar_select %p170, %s167, 1
        %s172 = smul.addr %s169, 2
        %s173 = sadd.s32 %s171, %s172
        %s174 = smul.addr %s173, 8
        %s175 = scalar_lea.vmem %s0, %s174
        %p176 = pneg %p52
        %p177 = pneg %p49
        %p178 = pneg %p73
        %p179 = pneg %p70
        %p180 = pneg %p94
        %p181 = pneg %p91
        %p182 = pneg %p122
        %p183 = pneg %p119
        %s184 = sand.u32 %s109, 1
        %s185 = scalar_lea.sflag [#allocation3], %s184
        %s186 = sand.u32 %s109, 1
        %s187 = smul.addr %s186, 128
        %s188 = scalar_lea.vmem [#allocation2], %s187
        %s189 = smul.u32 2, %s22
        %p190 = scmp.lt.s32.totalorder %s21, 1
        %s191 = scalar_select %p190, %s21, 1
        %p192 = scmp.lt.s32.totalorder %s189, 1
        %s193 = scalar_select %p192, %s189, 1
        %s194 = smul.addr %s191, 2
        %s195 = sadd.s32 %s193, %s194
        %s196 = smul.addr %s195, 8
        %s197 = scalar_lea.vmem %s0, %s196
        %s198 = smul.u32 2, %s22
        %s199 = smul.u32 2, %s22
        %v200 = vld [vmem:[%s197] sm:$0xff]
        %v201 = vld [vmem:[%s197 + $0x8] sm:$0xff]
        %v202 = vld [vmem:[%s1] sm:$0x1]
        %v204 = vlaneseq
        %v205 = vshrl.u32 %v204, 7
        %v206 = vsub.s32 0, %v205
        %v207 = vrot.slane %v202, %v206
        %v209 = vmul.f32 %v200, %v207
        %v210 = vmul.f32 %v201, %v207
        %v211 = vld [vmem:[%s2] sm:$0x1]
        %v213 = vlaneseq
        %v214 = vshrl.u32 %v213, 7
        %v215 = vsub.s32 0, %v214
        %v216 = vrot.slane %v211, %v215
        %v218 = vadd.f32 %v209, %v216
        %v219 = vadd.f32 %v210, %v216
        %v220 = vmax.f32 %v218, 0.0
        %v221 = vmax.f32 %v219, 0.0
        %vm222 = vcmask 130048
        %223 = vst.msk [vmem:[%s188] sm:$0xff] %vm222, %v220
        %224 = vst.msk [vmem:[%s188 + $0x8] sm:$0xff] %vm222, %v221
        %227 = vrot.lane.b32.xlu0 %v220, 112
        %v228 = vpop.permute.xlu0 %227
        %229 = vrot.lane.b32.xlu0 %v221, 112
        %v230 = vpop.permute.xlu0 %229
        %s233 = scalar_lea.vmem %s188, 16 [#allocation2]
        %234 = vst.msk [vmem:[%s233] sm:$0xff] %vm222, %v228
        %235 = vst.msk [vmem:[%s233 + $0x8] sm:$0xff] %vm222, %v230
        %236 = vrot.lane.b32.xlu0 %v220, 96
        %v237 = vpop.permute.xlu0 %236
        %238 = vrot.lane.b32.xlu0 %v221, 96
        %v239 = vpop.permute.xlu0 %238
        %s242 = scalar_lea.vmem %s188, 32 [#allocation2]
        %243 = vst.msk [vmem:[%s242] sm:$0xff] %vm222, %v237
        %244 = vst.msk [vmem:[%s242 + $0x8] sm:$0xff] %vm222, %v239
        %245 = vrot.lane.b32.xlu0 %v220, 80
        %v246 = vpop.permute.xlu0 %245
        %247 = vrot.lane.b32.xlu0 %v221, 80
        %v248 = vpop.permute.xlu0 %247
        %s251 = scalar_lea.vmem %s188, 48 [#allocation2]
        %252 = vst.msk [vmem:[%s251] sm:$0xff] %vm222, %v246
        %253 = vst.msk [vmem:[%s251 + $0x8] sm:$0xff] %vm222, %v248
        %254 = vrot.lane.b32.xlu0 %v220, 64
        %v255 = vpop.permute.xlu0 %254
        %256 = vrot.lane.b32.xlu0 %v221, 64
        %v257 = vpop.permute.xlu0 %256
        %s260 = scalar_lea.vmem %s188, 64 [#allocation2]
        %261 = vst.msk [vmem:[%s260] sm:$0xff] %vm222, %v255
        %262 = vst.msk [vmem:[%s260 + $0x8] sm:$0xff] %vm222, %v257
        %263 = vrot.lane.b32.xlu0 %v220, 48
        %v264 = vpop.permute.xlu0 %263
        %265 = vrot.lane.b32.xlu0 %v221, 48
        %v266 = vpop.permute.xlu0 %265
        %s269 = scalar_lea.vmem %s188, 80 [#allocation2]
        %270 = vst.msk [vmem:[%s269] sm:$0xff] %vm222, %v264
        %271 = vst.msk [vmem:[%s269 + $0x8] sm:$0xff] %vm222, %v266
        %272 = vrot.lane.b32.xlu0 %v220, 32
        %v273 = vpop.permute.xlu0 %272
        %274 = vrot.lane.b32.xlu0 %v221, 32
        %v275 = vpop.permute.xlu0 %274
        %s278 = scalar_lea.vmem %s188, 96 [#allocation2]
        %279 = vst.msk [vmem:[%s278] sm:$0xff] %vm222, %v273
        %280 = vst.msk [vmem:[%s278 + $0x8] sm:$0xff] %vm222, %v275
        %281 = vrot.lane.b32.xlu0 %v220, 16
        %v282 = vpop.permute.xlu0 %281
        %283 = vrot.lane.b32.xlu0 %v221, 16
        %v284 = vpop.permute.xlu0 %283
        %s287 = scalar_lea.vmem %s188, 112 [#allocation2]
        %288 = vst.msk [vmem:[%s287] sm:$0xff] %vm222, %v282
        %289 = vst.msk [vmem:[%s287 + $0x8] sm:$0xff] %vm222, %v284
        %s290 = sand.u32 %s109, 1
        %s291 = scalar_lea.sflag [#allocation3], %s290
        %s292 = sand.u32 %s109, 1
        %s293 = smul.addr %s292, 128
        %s294 = scalar_lea.vmem [#allocation2], %s293
        // Predicated region
        $region33: #{deconv_bnorm_relu_2d.3} parent=31 // pred_check
          %p295 = pneg %p119
        $region34: #{deconv_bnorm_relu_2d.3} parent=31 // pred_check_branch
          %297 = sbr.rel (%p295) target = $region36
        $region35: #{deconv_bnorm_relu_2d.3} parent=31 // pred_region
          %s298 = smul.u32 2, %s22
          %s300 = ssub.s32 2048, 2048
          %301 = vsyncadd %s291, %s300
          %s302 = smul.addr %s21, 16
          %s303 = sadd.s32 %s298, %s302
          %s304 = smul.addr %s303, 128
          %s305 = scalar_lea.hbm %s3, %s304
          %s306 = sshll.u32 %s294, 4
          %s307 = int_to_ptr.vmem [resolvable:$true] %s306
          %312 = dma.vmem_to_hbm [thread:$0]  %s307, 2048, %s305, %s291, 128, 128, 8
        $region36: #{deconv_bnorm_relu_2d.3} parent=31 // pred_fallthru
          _
      $region32: #{deconv_bnorm_relu_2d.3} parent=5 // pred_fallthru
        _
      %p313 = scmp.le.s32.totalorder 2, %s12
      // Predicated region
      $region37: #{deconv_bnorm_relu_2d.3} parent=5 // pred_check
        %p314 = pneg %p313
      $region38: #{deconv_bnorm_relu_2d.3} parent=5 // pred_check_branch
        %316 = sbr.rel (%p314) target = $region40
      $region39: #{deconv_bnorm_relu_2d.3} parent=5 // pred_region
        %s317 = ssub.s32 %s12, 2
        // Predicated region
        $region41: #{deconv_bnorm_relu_2d.3} parent=39 // pred_check
          %p318 = pneg %p125
        $region42: #{deconv_bnorm_relu_2d.3} parent=39 // pred_check_branch
          %320 = sbr.rel (%p318) target = $region44
        $region43: #{deconv_bnorm_relu_2d.3} parent=39 // pred_region
          %s321 = sand.u32 %s110, 1
          %s322 = scalar_lea.sflag [#allocation3], %s321
          %s323 = sand.u32 %s110, 1
          %s324 = smul.addr %s323, 128
          %s325 = scalar_lea.vmem [#allocation2], %s324
          %326 = dma.done %s322, 2048
        $region44: #{deconv_bnorm_relu_2d.3} parent=39 // pred_fallthru
          _
      $region40: #{deconv_bnorm_relu_2d.3} parent=5 // pred_fallthru
        _
    $region6: #{deconv_bnorm_relu_2d.3} parent=1 // loop_footer
      %s16 = sadd.s32 1, %s12
    $region7: #{deconv_bnorm_relu_2d.3} parent=1 // loop_footer_branch
      %11 = sbr.rel target = $region3
    $region8: #{deconv_bnorm_relu_2d.3} parent=1 // loop_exit
      _
    %327 = vsyncpa [#allocation3], 1
    %s328 = scalar_lea.sflag [#allocation3], 1
    %329 = vsyncpa %s328, 1

</llo_original>
